<compile_context>
chip_gen: v7x
topology: tpu7x:2x2x1
jax: 0.10.0
libtpu: 0.0.40
codegen_flags: <defaults>
</compile_context>

<pallas_src>
import jax
import jax.numpy as jnp
from jax.experimental import pallas as pl
from jax.experimental.pallas import tpu as pltpu


def _pad_value(dtype):
    """Padding value for max pooling (matches PyTorch: -inf for float dtypes)."""
    dtype = jnp.dtype(dtype)
    if jnp.issubdtype(dtype, jnp.floating):
        return float("-inf")
    return int(jnp.iinfo(dtype).min)


def _hpool3_s2(vv, ow, pad_val):
    """Horizontal 3-tap max, stride 2, pad 1: out[..., s] = max(vv[..., 2s-1 : 2s+2]).

    vv: (FB, R, W) value (vertical-pass result). Returns (FB, R, OW).
    Uses only unit-stride lane slices, jnp.maximum and an iota/where merge so the
    caller can do a single dense store.
    """
    fb, r, _ = vv.shape
    lane = jax.lax.broadcasted_iota(jnp.int32, (fb, r, ow), 2)
    out = jnp.full((fb, r, ow), pad_val, vv.dtype)
    # TODO(synk): for very wide feature maps a log-shift lane compaction (or a lane
    # gather) would cut the per-column VPU work; at RandWire feature-map widths this
    # loop is far below the HBM roofline.
    for s in range(ow):
        col = jnp.maximum(vv[:, :, 2 * s:2 * s + 1], vv[:, :, 2 * s + 1:2 * s + 2])
        if s > 0:
            col = jnp.maximum(col, vv[:, :, 2 * s - 1:2 * s])
        out = jnp.where(lane == s, col, out)
    return out


def _maxpool3x3_s2_p1_kernel(x_ref, o_ref):
    """One feature-block of 3x3 / stride-2 / pad-1 max pooling.

    x_ref: (FB, H,  W)   full-height input plane for FB features
    o_ref: (FB, OH, OW)  pooled output plane for the same features
    """
    _, toh, ow = o_ref.shape
    pad_val = _pad_value(o_ref.dtype)

    # Output row 0: input rows {-1 (padding), 0, 1}.
    v0 = jnp.maximum(x_ref[:, pl.ds(0, 1), :], x_ref[:, pl.ds(1, 1), :])
    o_ref[:, pl.ds(0, 1), :] = _hpool3_s2(v0, ow, pad_val)

    # Output rows t >= 1: input rows {2t-1, 2t, 2t+1} via sublane-strided loads.
    if toh > 1:
        ctr = x_ref[:, pl.ds(2, toh - 1, stride=2), :]   # rows 2t
        bot = x_ref[:, pl.ds(3, toh - 1, stride=2), :]   # rows 2t + 1
        top = x_ref[:, pl.ds(1, toh - 1, stride=2), :]   # rows 2t - 1
        vr = jnp.maximum(jnp.maximum(ctr, bot), top)
        o_ref[:, pl.ds(1, toh - 1), :] = _hpool3_s2(vr, ow, pad_val)


def _pick_feature_block(f, h, w, itemsize):
    """Choose the per-step feature-block size and an optional VMEM limit."""
    wpad = ((w + 127) // 128) * 128          # lane padding of the last dim in VMEM
    try:
        phys_vmem = pltpu.get_tpu_info().vmem_capacity_bytes
    except Exception:  # unknown backend / query unavailable -> stay conservative
        phys_vmem = 0
    if phys_vmem >= (100 << 20):             # 128-MiB-VMEM parts (v5e / v6e)
        in_cap = 4 << 20
        vmem_limit = 64 << 20
    else:                                    # 64-MiB parts (v7x) or unknown
        in_cap = 2 << 20
        vmem_limit = None

    per_f = h * wpad * itemsize              # VMEM bytes for one feature's (H, W) plane
    fb_cap = max(1, in_cap // per_f)         # stay under the per-block budget
    min_fb = max(1, (256 << 10) // per_f)    # keep DMA steps >= ~256 KiB
    # Target ~8 grid steps when N*C allows (megacore work on v7x + real pipelining),
    # without shrinking blocks below min_fb or exceeding the VMEM cap.
    fb = max(1, min(fb_cap, f, max(min_fb, pl.cdiv(f, 8))))
    return fb, vmem_limit


@jax.jit
def sampling_forward(x_nchw):
    """Equivalent of Sampling.forward: MaxPool2d(kernel_size=3, stride=2, padding=1)."""
    n, c, h, w = x_nchw.shape
    # TODO(synk): odd spatial dims (PyTorch output floor((D-1)/2)+1) would need
    # bottom/right edge masking; RandWire uses even spatial dims.
    assert h % 2 == 0 and w % 2 == 0, "kernel assumes even spatial dims"
    oh, ow = h // 2, w // 2
    f = n * c
    dtype = x_nchw.dtype
    itemsize = jnp.dtype(dtype).itemsize

    fb, vmem_limit = _pick_feature_block(f, h, w, itemsize)

    # Free reshapes (merge/split of leading dims only) -- no HBM relayout traffic.
    x_f = x_nchw.reshape(f, h, w)

    compiler_kwargs = dict(dimension_semantics=("parallel",))
    if vmem_limit is not None:
        compiler_kwargs["vmem_limit_bytes"] = vmem_limit

    out_f = pl.pallas_call(
        _maxpool3x3_s2_p1_kernel,
        out_shape=jax.ShapeDtypeStruct((f, oh, ow), dtype),
        grid=(pl.cdiv(f, fb),),
        in_specs=[pl.BlockSpec((fb, h, w), lambda i: (i, 0, 0))],
        out_specs=pl.BlockSpec((fb, oh, ow), lambda i: (i, 0, 0)),
        compiler_params=pltpu.CompilerParams(**compiler_kwargs),
    )(x_f)

    return out_f.reshape(n, c, oh, ow)


def _reference_maxpool(x_nchw):
    """Pure-JAX reference (lax.reduce_window) for the correctness check."""
    return jax.lax.reduce_window(
        x_nchw,
        -jnp.inf,
        jax.lax.max,
        window_dimensions=(1, 1, 3, 3),
        window_strides=(1, 1, 2, 2),
        padding=((0, 0), (0, 0), (1, 1), (1, 1)),
    )


if __name__ == "__main__":
    key = jax.random.PRNGKey(0)
    k1, k2 = jax.random.split(key)

    # Primary test shape (NCHW), matching the PyTorch module's input convention.
    x = jax.random.normal(k1, (2, 4, 16, 16), dtype=jnp.float32)
    out = jax.block_until_ready(sampling_forward(x))
    ref = _reference_maxpool(x)
    assert out.shape == (2, 4, 8, 8), out.shape
    assert jnp.allclose(out, ref, atol=1e-6, rtol=1e-6), "mismatch vs reference"

    # Secondary shape exercising multiple feature blocks / grid steps (N*C = 128).
    x2 = jax.random.normal(k2, (2, 64, 16, 16), dtype=jnp.float32)
    out2 = jax.block_until_ready(sampling_forward(x2))
    ref2 = _reference_maxpool(x2)
    assert out2.shape == (2, 64, 8, 8), out2.shape
    assert jnp.allclose(out2, ref2, atol=1e-6, rtol=1e-6), "mismatch (multi-block)"

    print("KERNEL_OK")
</pallas_src>

<mosaic_0001>
module attributes {stable_mosaic.version = 11 : i64} {
  func.func @_maxpool3x3_s2_p1_kernel(%arg0: i32, %arg1: memref<8x16x16xf32, #tpu.memory_space<vmem>>, %arg2: memref<8x8x8xf32, #tpu.memory_space<vmem>>) attributes {dimension_semantics = [#tpu.dimension_semantics<parallel>], iteration_bounds = array<i64: 1>, scalar_prefetch = 0 : i64, scratch_operands = 0 : i64, tpu.core_type = #tpu.core_type<tc>, window_params = [{transform_indices = @transform_0, window_bounds = array<i64: 8, 16, 16>}, {transform_indices = @transform_1, window_bounds = array<i64: 8, 8, 8>}]} {
    %c0 = arith.constant 0 : index
    %c0_0 = arith.constant 0 : index
    %c0_1 = arith.constant 0 : index
    %0 = vector.load %arg1[%c0, %c0_0, %c0_1] : memref<8x16x16xf32, #tpu.memory_space<vmem>>, vector<8x1x16xf32>
    %c0_2 = arith.constant 0 : index
    %c1 = arith.constant 1 : index
    %c0_3 = arith.constant 0 : index
    %1 = vector.load %arg1[%c0_2, %c1, %c0_3] : memref<8x16x16xf32, #tpu.memory_space<vmem>>, vector<8x1x16xf32>
    %2 = arith.maximumf %0, %1 : vector<8x1x16xf32>
    %3 = tpu.iota {dimensions = array<i32: 2>} : vector<8x1x8xi32>
    %cst = arith.constant 0xFF800000 : f32
    %4 = vector.broadcast %cst : f32 to vector<8x1x8xf32>
    %5 = vector.extract_strided_slice %2 {offsets = [0, 0, 0], sizes = [8, 1, 1], strides = [1, 1, 1]} : vector<8x1x16xf32> to vector<8x1x1xf32>
    %6 = vector.extract_strided_slice %2 {offsets = [0, 0, 1], sizes = [8, 1, 1], strides = [1, 1, 1]} : vector<8x1x16xf32> to vector<8x1x1xf32>
    %7 = arith.maximumf %5, %6 : vector<8x1x1xf32>
    %c0_i32 = arith.constant 0 : i32
    %8 = vector.broadcast %c0_i32 : i32 to vector<8x1x8xi32>
    %9 = arith.cmpi eq, %3, %8 : vector<8x1x8xi32>
    %10 = vector.shape_cast %7 : vector<8x1x1xf32> to vector<8x1x1xf32>
    %11 = vector.broadcast %10 : vector<8x1x1xf32> to vector<8x1x8xf32>
    %12 = arith.select %9, %11, %4 : vector<8x1x8xi1>, vector<8x1x8xf32>
    %13 = vector.extract_strided_slice %2 {offsets = [0, 0, 2], sizes = [8, 1, 1], strides = [1, 1, 1]} : vector<8x1x16xf32> to vector<8x1x1xf32>
    %14 = vector.extract_strided_slice %2 {offsets = [0, 0, 3], sizes = [8, 1, 1], strides = [1, 1, 1]} : vector<8x1x16xf32> to vector<8x1x1xf32>
    %15 = arith.maximumf %13, %14 : vector<8x1x1xf32>
    %16 = vector.extract_strided_slice %2 {offsets = [0, 0, 1], sizes = [8, 1, 1], strides = [1, 1, 1]} : vector<8x1x16xf32> to vector<8x1x1xf32>
    %17 = arith.maximumf %15, %16 : vector<8x1x1xf32>
    %c1_i32 = arith.constant 1 : i32
    %18 = vector.broadcast %c1_i32 : i32 to vector<8x1x8xi32>
    %19 = arith.cmpi eq, %3, %18 : vector<8x1x8xi32>
    %20 = vector.shape_cast %17 : vector<8x1x1xf32> to vector<8x1x1xf32>
    %21 = vector.broadcast %20 : vector<8x1x1xf32> to vector<8x1x8xf32>
    %22 = arith.select %19, %21, %12 : vector<8x1x8xi1>, vector<8x1x8xf32>
    %23 = vector.extract_strided_slice %2 {offsets = [0, 0, 4], sizes = [8, 1, 1], strides = [1, 1, 1]} : vector<8x1x16xf32> to vector<8x1x1xf32>
    %24 = vector.extract_strided_slice %2 {offsets = [0, 0, 5], sizes = [8, 1, 1], strides = [1, 1, 1]} : vector<8x1x16xf32> to vector<8x1x1xf32>
    %25 = arith.maximumf %23, %24 : vector<8x1x1xf32>
    %26 = vector.extract_strided_slice %2 {offsets = [0, 0, 3], sizes = [8, 1, 1], strides = [1, 1, 1]} : vector<8x1x16xf32> to vector<8x1x1xf32>
    %27 = arith.maximumf %25, %26 : vector<8x1x1xf32>
    %c2_i32 = arith.constant 2 : i32
    %28 = vector.broadcast %c2_i32 : i32 to vector<8x1x8xi32>
    %29 = arith.cmpi eq, %3, %28 : vector<8x1x8xi32>
    %30 = vector.shape_cast %27 : vector<8x1x1xf32> to vector<8x1x1xf32>
    %31 = vector.broadcast %30 : vector<8x1x1xf32> to vector<8x1x8xf32>
    %32 = arith.select %29, %31, %22 : vector<8x1x8xi1>, vector<8x1x8xf32>
    %33 = vector.extract_strided_slice %2 {offsets = [0, 0, 6], sizes = [8, 1, 1], strides = [1, 1, 1]} : vector<8x1x16xf32> to vector<8x1x1xf32>
    %34 = vector.extract_strided_slice %2 {offsets = [0, 0, 7], sizes = [8, 1, 1], strides = [1, 1, 1]} : vector<8x1x16xf32> to vector<8x1x1xf32>
    %35 = arith.maximumf %33, %34 : vector<8x1x1xf32>
    %36 = vector.extract_strided_slice %2 {offsets = [0, 0, 5], sizes = [8, 1, 1], strides = [1, 1, 1]} : vector<8x1x16xf32> to vector<8x1x1xf32>
    %37 = arith.maximumf %35, %36 : vector<8x1x1xf32>
    %c3_i32 = arith.constant 3 : i32
    %38 = vector.broadcast %c3_i32 : i32 to vector<8x1x8xi32>
    %39 = arith.cmpi eq, %3, %38 : vector<8x1x8xi32>
    %40 = vector.shape_cast %37 : vector<8x1x1xf32> to vector<8x1x1xf32>
    %41 = vector.broadcast %40 : vector<8x1x1xf32> to vector<8x1x8xf32>
    %42 = arith.select %39, %41, %32 : vector<8x1x8xi1>, vector<8x1x8xf32>
    %43 = vector.extract_strided_slice %2 {offsets = [0, 0, 8], sizes = [8, 1, 1], strides = [1, 1, 1]} : vector<8x1x16xf32> to vector<8x1x1xf32>
    %44 = vector.extract_strided_slice %2 {offsets = [0, 0, 9], sizes = [8, 1, 1], strides = [1, 1, 1]} : vector<8x1x16xf32> to vector<8x1x1xf32>
    %45 = arith.maximumf %43, %44 : vector<8x1x1xf32>
    %46 = vector.extract_strided_slice %2 {offsets = [0, 0, 7], sizes = [8, 1, 1], strides = [1, 1, 1]} : vector<8x1x16xf32> to vector<8x1x1xf32>
    %47 = arith.maximumf %45, %46 : vector<8x1x1xf32>
    %c4_i32 = arith.constant 4 : i32
    %48 = vector.broadcast %c4_i32 : i32 to vector<8x1x8xi32>
    %49 = arith.cmpi eq, %3, %48 : vector<8x1x8xi32>
    %50 = vector.shape_cast %47 : vector<8x1x1xf32> to vector<8x1x1xf32>
    %51 = vector.broadcast %50 : vector<8x1x1xf32> to vector<8x1x8xf32>
    %52 = arith.select %49, %51, %42 : vector<8x1x8xi1>, vector<8x1x8xf32>
    %53 = vector.extract_strided_slice %2 {offsets = [0, 0, 10], sizes = [8, 1, 1], strides = [1, 1, 1]} : vector<8x1x16xf32> to vector<8x1x1xf32>
    %54 = vector.extract_strided_slice %2 {offsets = [0, 0, 11], sizes = [8, 1, 1], strides = [1, 1, 1]} : vector<8x1x16xf32> to vector<8x1x1xf32>
    %55 = arith.maximumf %53, %54 : vector<8x1x1xf32>
    %56 = vector.extract_strided_slice %2 {offsets = [0, 0, 9], sizes = [8, 1, 1], strides = [1, 1, 1]} : vector<8x1x16xf32> to vector<8x1x1xf32>
    %57 = arith.maximumf %55, %56 : vector<8x1x1xf32>
    %c5_i32 = arith.constant 5 : i32
    %58 = vector.broadcast %c5_i32 : i32 to vector<8x1x8xi32>
    %59 = arith.cmpi eq, %3, %58 : vector<8x1x8xi32>
    %60 = vector.shape_cast %57 : vector<8x1x1xf32> to vector<8x1x1xf32>
    %61 = vector.broadcast %60 : vector<8x1x1xf32> to vector<8x1x8xf32>
    %62 = arith.select %59, %61, %52 : vector<8x1x8xi1>, vector<8x1x8xf32>
    %63 = vector.extract_strided_slice %2 {offsets = [0, 0, 12], sizes = [8, 1, 1], strides = [1, 1, 1]} : vector<8x1x16xf32> to vector<8x1x1xf32>
    %64 = vector.extract_strided_slice %2 {offsets = [0, 0, 13], sizes = [8, 1, 1], strides = [1, 1, 1]} : vector<8x1x16xf32> to vector<8x1x1xf32>
    %65 = arith.maximumf %63, %64 : vector<8x1x1xf32>
    %66 = vector.extract_strided_slice %2 {offsets = [0, 0, 11], sizes = [8, 1, 1], strides = [1, 1, 1]} : vector<8x1x16xf32> to vector<8x1x1xf32>
    %67 = arith.maximumf %65, %66 : vector<8x1x1xf32>
    %c6_i32 = arith.constant 6 : i32
    %68 = vector.broadcast %c6_i32 : i32 to vector<8x1x8xi32>
    %69 = arith.cmpi eq, %3, %68 : vector<8x1x8xi32>
    %70 = vector.shape_cast %67 : vector<8x1x1xf32> to vector<8x1x1xf32>
    %71 = vector.broadcast %70 : vector<8x1x1xf32> to vector<8x1x8xf32>
    %72 = arith.select %69, %71, %62 : vector<8x1x8xi1>, vector<8x1x8xf32>
    %73 = vector.extract_strided_slice %2 {offsets = [0, 0, 14], sizes = [8, 1, 1], strides = [1, 1, 1]} : vector<8x1x16xf32> to vector<8x1x1xf32>
    %74 = vector.extract_strided_slice %2 {offsets = [0, 0, 15], sizes = [8, 1, 1], strides = [1, 1, 1]} : vector<8x1x16xf32> to vector<8x1x1xf32>
    %75 = arith.maximumf %73, %74 : vector<8x1x1xf32>
    %76 = vector.extract_strided_slice %2 {offsets = [0, 0, 13], sizes = [8, 1, 1], strides = [1, 1, 1]} : vector<8x1x16xf32> to vector<8x1x1xf32>
    %77 = arith.maximumf %75, %76 : vector<8x1x1xf32>
    %c7_i32 = arith.constant 7 : i32
    %78 = vector.broadcast %c7_i32 : i32 to vector<8x1x8xi32>
    %79 = arith.cmpi eq, %3, %78 : vector<8x1x8xi32>
    %80 = vector.shape_cast %77 : vector<8x1x1xf32> to vector<8x1x1xf32>
    %81 = vector.broadcast %80 : vector<8x1x1xf32> to vector<8x1x8xf32>
    %82 = arith.select %79, %81, %72 : vector<8x1x8xi1>, vector<8x1x8xf32>
    %c0_4 = arith.constant 0 : index
    %c0_5 = arith.constant 0 : index
    %c0_6 = arith.constant 0 : index
    %83 = vector.load %arg2[%c0_4, %c0_5, %c0_6] : memref<8x8x8xf32, #tpu.memory_space<vmem>>, vector<8x1x8xf32>
    tpu.vector_store %arg2[%c0_4, %c0_5, %c0_6], %82 {strides = array<i32>} : memref<8x8x8xf32, #tpu.memory_space<vmem>>, vector<8x1x8xf32>,
    %c0_7 = arith.constant 0 : index
    %c2 = arith.constant 2 : index
    %c0_8 = arith.constant 0 : index
    %84 = tpu.strided_load %arg1[%c0_7, %c2, %c0_8] {strides = array<i32: 1, 2, 1>} : memref<8x16x16xf32, #tpu.memory_space<vmem>>, vector<8x7x16xf32>
    %c0_9 = arith.constant 0 : index
    %c3 = arith.constant 3 : index
    %c0_10 = arith.constant 0 : index
    %85 = tpu.strided_load %arg1[%c0_9, %c3, %c0_10] {strides = array<i32: 1, 2, 1>} : memref<8x16x16xf32, #tpu.memory_space<vmem>>, vector<8x7x16xf32>
    %c0_11 = arith.constant 0 : index
    %c1_12 = arith.constant 1 : index
    %c0_13 = arith.constant 0 : index
    %86 = tpu.strided_load %arg1[%c0_11, %c1_12, %c0_13] {strides = array<i32: 1, 2, 1>} : memref<8x16x16xf32, #tpu.memory_space<vmem>>, vector<8x7x16xf32>
    %87 = arith.maximumf %84, %85 : vector<8x7x16xf32>
    %88 = arith.maximumf %87, %86 : vector<8x7x16xf32>
    %89 = tpu.iota {dimensions = array<i32: 2>} : vector<8x7x8xi32>
    %cst_14 = arith.constant 0xFF800000 : f32
    %90 = vector.broadcast %cst_14 : f32 to vector<8x7x8xf32>
    %91 = vector.extract_strided_slice %88 {offsets = [0, 0, 0], sizes = [8, 7, 1], strides = [1, 1, 1]} : vector<8x7x16xf32> to vector<8x7x1xf32>
    %92 = vector.extract_strided_slice %88 {offsets = [0, 0, 1], sizes = [8, 7, 1], strides = [1, 1, 1]} : vector<8x7x16xf32> to vector<8x7x1xf32>
    %93 = arith.maximumf %91, %92 : vector<8x7x1xf32>
    %c0_i32_15 = arith.constant 0 : i32
    %94 = vector.broadcast %c0_i32_15 : i32 to vector<8x7x8xi32>
    %95 = arith.cmpi eq, %89, %94 : vector<8x7x8xi32>
    %96 = vector.shape_cast %93 : vector<8x7x1xf32> to vector<8x7x1xf32>
    %97 = vector.broadcast %96 : vector<8x7x1xf32> to vector<8x7x8xf32>
    %98 = arith.select %95, %97, %90 : vector<8x7x8xi1>, vector<8x7x8xf32>
    %99 = vector.extract_strided_slice %88 {offsets = [0, 0, 2], sizes = [8, 7, 1], strides = [1, 1, 1]} : vector<8x7x16xf32> to vector<8x7x1xf32>
    %100 = vector.extract_strided_slice %88 {offsets = [0, 0, 3], sizes = [8, 7, 1], strides = [1, 1, 1]} : vector<8x7x16xf32> to vector<8x7x1xf32>
    %101 = arith.maximumf %99, %100 : vector<8x7x1xf32>
    %102 = vector.extract_strided_slice %88 {offsets = [0, 0, 1], sizes = [8, 7, 1], strides = [1, 1, 1]} : vector<8x7x16xf32> to vector<8x7x1xf32>
    %103 = arith.maximumf %101, %102 : vector<8x7x1xf32>
    %c1_i32_16 = arith.constant 1 : i32
    %104 = vector.broadcast %c1_i32_16 : i32 to vector<8x7x8xi32>
    %105 = arith.cmpi eq, %89, %104 : vector<8x7x8xi32>
    %106 = vector.shape_cast %103 : vector<8x7x1xf32> to vector<8x7x1xf32>
    %107 = vector.broadcast %106 : vector<8x7x1xf32> to vector<8x7x8xf32>
    %108 = arith.select %105, %107, %98 : vector<8x7x8xi1>, vector<8x7x8xf32>
    %109 = vector.extract_strided_slice %88 {offsets = [0, 0, 4], sizes = [8, 7, 1], strides = [1, 1, 1]} : vector<8x7x16xf32> to vector<8x7x1xf32>
    %110 = vector.extract_strided_slice %88 {offsets = [0, 0, 5], sizes = [8, 7, 1], strides = [1, 1, 1]} : vector<8x7x16xf32> to vector<8x7x1xf32>
    %111 = arith.maximumf %109, %110 : vector<8x7x1xf32>
    %112 = vector.extract_strided_slice %88 {offsets = [0, 0, 3], sizes = [8, 7, 1], strides = [1, 1, 1]} : vector<8x7x16xf32> to vector<8x7x1xf32>
    %113 = arith.maximumf %111, %112 : vector<8x7x1xf32>
    %c2_i32_17 = arith.constant 2 : i32
    %114 = vector.broadcast %c2_i32_17 : i32 to vector<8x7x8xi32>
    %115 = arith.cmpi eq, %89, %114 : vector<8x7x8xi32>
    %116 = vector.shape_cast %113 : vector<8x7x1xf32> to vector<8x7x1xf32>
    %117 = vector.broadcast %116 : vector<8x7x1xf32> to vector<8x7x8xf32>
    %118 = arith.select %115, %117, %108 : vector<8x7x8xi1>, vector<8x7x8xf32>
    %119 = vector.extract_strided_slice %88 {offsets = [0, 0, 6], sizes = [8, 7, 1], strides = [1, 1, 1]} : vector<8x7x16xf32> to vector<8x7x1xf32>
    %120 = vector.extract_strided_slice %88 {offsets = [0, 0, 7], sizes = [8, 7, 1], strides = [1, 1, 1]} : vector<8x7x16xf32> to vector<8x7x1xf32>
    %121 = arith.maximumf %119, %120 : vector<8x7x1xf32>
    %122 = vector.extract_strided_slice %88 {offsets = [0, 0, 5], sizes = [8, 7, 1], strides = [1, 1, 1]} : vector<8x7x16xf32> to vector<8x7x1xf32>
    %123 = arith.maximumf %121, %122 : vector<8x7x1xf32>
    %c3_i32_18 = arith.constant 3 : i32
    %124 = vector.broadcast %c3_i32_18 : i32 to vector<8x7x8xi32>
    %125 = arith.cmpi eq, %89, %124 : vector<8x7x8xi32>
    %126 = vector.shape_cast %123 : vector<8x7x1xf32> to vector<8x7x1xf32>
    %127 = vector.broadcast %126 : vector<8x7x1xf32> to vector<8x7x8xf32>
    %128 = arith.select %125, %127, %118 : vector<8x7x8xi1>, vector<8x7x8xf32>
    %129 = vector.extract_strided_slice %88 {offsets = [0, 0, 8], sizes = [8, 7, 1], strides = [1, 1, 1]} : vector<8x7x16xf32> to vector<8x7x1xf32>
    %130 = vector.extract_strided_slice %88 {offsets = [0, 0, 9], sizes = [8, 7, 1], strides = [1, 1, 1]} : vector<8x7x16xf32> to vector<8x7x1xf32>
    %131 = arith.maximumf %129, %130 : vector<8x7x1xf32>
    %132 = vector.extract_strided_slice %88 {offsets = [0, 0, 7], sizes = [8, 7, 1], strides = [1, 1, 1]} : vector<8x7x16xf32> to vector<8x7x1xf32>
    %133 = arith.maximumf %131, %132 : vector<8x7x1xf32>
    %c4_i32_19 = arith.constant 4 : i32
    %134 = vector.broadcast %c4_i32_19 : i32 to vector<8x7x8xi32>
    %135 = arith.cmpi eq, %89, %134 : vector<8x7x8xi32>
    %136 = vector.shape_cast %133 : vector<8x7x1xf32> to vector<8x7x1xf32>
    %137 = vector.broadcast %136 : vector<8x7x1xf32> to vector<8x7x8xf32>
    %138 = arith.select %135, %137, %128 : vector<8x7x8xi1>, vector<8x7x8xf32>
    %139 = vector.extract_strided_slice %88 {offsets = [0, 0, 10], sizes = [8, 7, 1], strides = [1, 1, 1]} : vector<8x7x16xf32> to vector<8x7x1xf32>
    %140 = vector.extract_strided_slice %88 {offsets = [0, 0, 11], sizes = [8, 7, 1], strides = [1, 1, 1]} : vector<8x7x16xf32> to vector<8x7x1xf32>
    %141 = arith.maximumf %139, %140 : vector<8x7x1xf32>
    %142 = vector.extract_strided_slice %88 {offsets = [0, 0, 9], sizes = [8, 7, 1], strides = [1, 1, 1]} : vector<8x7x16xf32> to vector<8x7x1xf32>
    %143 = arith.maximumf %141, %142 : vector<8x7x1xf32>
    %c5_i32_20 = arith.constant 5 : i32
    %144 = vector.broadcast %c5_i32_20 : i32 to vector<8x7x8xi32>
    %145 = arith.cmpi eq, %89, %144 : vector<8x7x8xi32>
    %146 = vector.shape_cast %143 : vector<8x7x1xf32> to vector<8x7x1xf32>
    %147 = vector.broadcast %146 : vector<8x7x1xf32> to vector<8x7x8xf32>
    %148 = arith.select %145, %147, %138 : vector<8x7x8xi1>, vector<8x7x8xf32>
    %149 = vector.extract_strided_slice %88 {offsets = [0, 0, 12], sizes = [8, 7, 1], strides = [1, 1, 1]} : vector<8x7x16xf32> to vector<8x7x1xf32>
    %150 = vector.extract_strided_slice %88 {offsets = [0, 0, 13], sizes = [8, 7, 1], strides = [1, 1, 1]} : vector<8x7x16xf32> to vector<8x7x1xf32>
    %151 = arith.maximumf %149, %150 : vector<8x7x1xf32>
    %152 = vector.extract_strided_slice %88 {offsets = [0, 0, 11], sizes = [8, 7, 1], strides = [1, 1, 1]} : vector<8x7x16xf32> to vector<8x7x1xf32>
    %153 = arith.maximumf %151, %152 : vector<8x7x1xf32>
    %c6_i32_21 = arith.constant 6 : i32
    %154 = vector.broadcast %c6_i32_21 : i32 to vector<8x7x8xi32>
    %155 = arith.cmpi eq, %89, %154 : vector<8x7x8xi32>
    %156 = vector.shape_cast %153 : vector<8x7x1xf32> to vector<8x7x1xf32>
    %157 = vector.broadcast %156 : vector<8x7x1xf32> to vector<8x7x8xf32>
    %158 = arith.select %155, %157, %148 : vector<8x7x8xi1>, vector<8x7x8xf32>
    %159 = vector.extract_strided_slice %88 {offsets = [0, 0, 14], sizes = [8, 7, 1], strides = [1, 1, 1]} : vector<8x7x16xf32> to vector<8x7x1xf32>
    %160 = vector.extract_strided_slice %88 {offsets = [0, 0, 15], sizes = [8, 7, 1], strides = [1, 1, 1]} : vector<8x7x16xf32> to vector<8x7x1xf32>
    %161 = arith.maximumf %159, %160 : vector<8x7x1xf32>
    %162 = vector.extract_strided_slice %88 {offsets = [0, 0, 13], sizes = [8, 7, 1], strides = [1, 1, 1]} : vector<8x7x16xf32> to vector<8x7x1xf32>
    %163 = arith.maximumf %161, %162 : vector<8x7x1xf32>
    %c7_i32_22 = arith.constant 7 : i32
    %164 = vector.broadcast %c7_i32_22 : i32 to vector<8x7x8xi32>
    %165 = arith.cmpi eq, %89, %164 : vector<8x7x8xi32>
    %166 = vector.shape_cast %163 : vector<8x7x1xf32> to vector<8x7x1xf32>
    %167 = vector.broadcast %166 : vector<8x7x1xf32> to vector<8x7x8xf32>
    %168 = arith.select %165, %167, %158 : vector<8x7x8xi1>, vector<8x7x8xf32>
    %c0_23 = arith.constant 0 : index
    %c1_24 = arith.constant 1 : index
    %c0_25 = arith.constant 0 : index
    %169 = vector.load %arg2[%c0_23, %c1_24, %c0_25] : memref<8x8x8xf32, #tpu.memory_space<vmem>>, vector<8x7x8xf32>
    tpu.vector_store %arg2[%c0_23, %c1_24, %c0_25], %168 {strides = array<i32>} : memref<8x8x8xf32, #tpu.memory_space<vmem>>, vector<8x7x8xf32>,
    return
  }
  func.func @transform_0(%arg0: i32) -> (i32, i32, i32) {
    %c0_i32 = arith.constant 0 : i32
    %c0_i32_0 = arith.constant 0 : i32
    %c0_i32_1 = arith.constant 0 : i32
    return %arg0, %c0_i32, %c0_i32_0 : i32, i32, i32
  }
  func.func @transform_1(%arg0: i32) -> (i32, i32, i32) {
    %c0_i32 = arith.constant 0 : i32
    %c0_i32_0 = arith.constant 0 : i32
    %c0_i32_1 = arith.constant 0 : i32
    return %arg0, %c0_i32, %c0_i32_0 : i32, i32, i32
  }
}

</mosaic_0001>

<llo_original>
// kernel: sampling_forward.1
$region0: #{sampling_forward.1}
  #allocation0 [shape = 'u32[]', space=smem, size = 0x4, offset = 0x4, fixed_abs, tag = 'smem constant byte address 0x4 - core index']
  #allocation1 [shape = 'u32[144,128]{1,0:T(1,128)}', space=vmem, size = 0x12000, scoped, tag = 'internal scratch']
  %s0 = inlined_call_operand.hbm [shape: f32[8,16,16], index: 0, kind: input, shape index: {}]
  %s1 = inlined_call_operand.hbm [shape: f32[8,8,8], index: 1, kind: output, shape index: {}]
  %s2 = sld [smem:[#allocation0]]
  $region18: #{sampling_forward.1} parent=0
    _
  %s4 = ssub.s32 1, %s2
  %s5 = scalar_select 0, %s4, %s2
  $region1: #{sampling_forward.1} parent=0
    #allocation2 [shape = 'u8[65536]{0}', space=vmem, size = 0x10000, scoped, tag = 'input window, operand 0, single buffered']
    #allocation3 [shape = 's32[1]{0}', space=sflag, size = 0x4, scoped, tag = 'scoped memory for sampling_forward.1']
    #allocation4 [shape = 's32[1]{0}', space=sflag, size = 0x4, scoped, tag = 'scoped memory for sampling_forward.1']
    #allocation5 [shape = 'u8[32768]{0}', space=vmem, size = 0x8000, scoped, tag = 'output window, operand 0, single buffered']
    %6 = vsyncpa [#allocation3], 0
    %7 = vsyncpa [#allocation4], 0
    // Predicated region
    $region2: #{sampling_forward.1} parent=1 // pred_check
      _
    $region3: #{sampling_forward.1} parent=1 // pred_check_branch
      %9 = sbr.rel (0) target = $region5
    $region4: #{sampling_forward.1} parent=1 // pred_region
      %s11 = ssub.s32 2048, 2048
      %12 = vsyncadd [#allocation3], %s11
      %s13 = sshll.u32 [#allocation2], 4
      %s14 = int_to_ptr.vmem [resolvable:$true] %s13
      %19 = dma.hbm_to_vmem [thread:$0]  %s0, 2048, %s14, [#allocation3], 128, 128, 8
    $region5: #{sampling_forward.1} parent=1 // pred_fallthru
      _
    // Predicated region
    $region6: #{sampling_forward.1} parent=1 // pred_check
      _
    $region7: #{sampling_forward.1} parent=1 // pred_check_branch
      %21 = sbr.rel (0) target = $region9
    $region8: #{sampling_forward.1} parent=1 // pred_region
      %22 = dma.done [#allocation3], 2048
    $region9: #{sampling_forward.1} parent=1 // pred_fallthru
      _
    %v23 = vld [vmem:[#allocation2] sm:$0x1]
    %v24 = vld [vmem:[#allocation2 + $0x10] sm:$0x1]
    %v25 = vld [vmem:[#allocation2 + $0x20] sm:$0x1]
    %v26 = vld [vmem:[#allocation2 + $0x30] sm:$0x1]
    %v27 = vld [vmem:[#allocation2 + $0x40] sm:$0x1]
    %v28 = vld [vmem:[#allocation2 + $0x50] sm:$0x1]
    %v29 = vld [vmem:[#allocation2 + $0x60] sm:$0x1]
    %v30 = vld [vmem:[#allocation2 + $0x70] sm:$0x1]
    %v31 = vld [vmem:[#allocation2 + $0x1] sm:$0x1]
    %v32 = vld [vmem:[#allocation2 + $0x11] sm:$0x1]
    %v33 = vld [vmem:[#allocation2 + $0x21] sm:$0x1]
    %v34 = vld [vmem:[#allocation2 + $0x31] sm:$0x1]
    %v35 = vld [vmem:[#allocation2 + $0x41] sm:$0x1]
    %v36 = vld [vmem:[#allocation2 + $0x51] sm:$0x1]
    %v37 = vld [vmem:[#allocation2 + $0x61] sm:$0x1]
    %v38 = vld [vmem:[#allocation2 + $0x71] sm:$0x1]
    %v39 = vmax.f32 %v23, %v31
    %v40 = vmax.f32 %v24, %v32
    %v41 = vmax.f32 %v25, %v33
    %v42 = vmax.f32 %v26, %v34
    %v43 = vmax.f32 %v27, %v35
    %v44 = vmax.f32 %v28, %v36
    %v45 = vmax.f32 %v29, %v37
    %v46 = vmax.f32 %v30, %v38
    %v47 = vlaneseq
    %v48 = vand.u32 %v47, 127
    %57 = vrot.lane.b32.xlu0 %v39, 127
    %v58 = vpop.permute.xlu0 %57
    %59 = vrot.lane.b32.xlu0 %v40, 127
    %v60 = vpop.permute.xlu0 %59
    %61 = vrot.lane.b32.xlu0 %v41, 127
    %v62 = vpop.permute.xlu0 %61
    %63 = vrot.lane.b32.xlu0 %v42, 127
    %v64 = vpop.permute.xlu0 %63
    %65 = vrot.lane.b32.xlu0 %v43, 127
    %v66 = vpop.permute.xlu0 %65
    %67 = vrot.lane.b32.xlu0 %v44, 127
    %v68 = vpop.permute.xlu0 %67
    %69 = vrot.lane.b32.xlu0 %v45, 127
    %v70 = vpop.permute.xlu0 %69
    %71 = vrot.lane.b32.xlu0 %v46, 127
    %v72 = vpop.permute.xlu0 %71
    %v81 = vmax.f32 %v39, %v58
    %v82 = vmax.f32 %v40, %v60
    %v83 = vmax.f32 %v41, %v62
    %v84 = vmax.f32 %v42, %v64
    %v85 = vmax.f32 %v43, %v66
    %v86 = vmax.f32 %v44, %v68
    %v87 = vmax.f32 %v45, %v70
    %v88 = vmax.f32 %v46, %v72
    %vm89 = vcmp.eq.s32.totalorder %v48, 0
    %91 = vset.pattern.permute.xlu0 0
    %92 = vperm.xlu0 %91, %v81
    %v93 = vpop.permute.xlu0 %92
    %96 = vset.pattern.permute.xlu0 0
    %97 = vperm.xlu0 %96, %v82
    %v98 = vpop.permute.xlu0 %97
    %101 = vset.pattern.permute.xlu0 0
    %102 = vperm.xlu0 %101, %v83
    %v103 = vpop.permute.xlu0 %102
    %106 = vset.pattern.permute.xlu0 0
    %107 = vperm.xlu0 %106, %v84
    %v108 = vpop.permute.xlu0 %107
    %111 = vset.pattern.permute.xlu0 0
    %112 = vperm.xlu0 %111, %v85
    %v113 = vpop.permute.xlu0 %112
    %116 = vset.pattern.permute.xlu0 0
    %117 = vperm.xlu0 %116, %v86
    %v118 = vpop.permute.xlu0 %117
    %121 = vset.pattern.permute.xlu0 0
    %122 = vperm.xlu0 %121, %v87
    %v123 = vpop.permute.xlu0 %122
    %126 = vset.pattern.permute.xlu0 0
    %127 = vperm.xlu0 %126, %v88
    %v128 = vpop.permute.xlu0 %127
    %v130 = vsel %vm89, %v93, -inf
    %v131 = vsel %vm89, %v98, -inf
    %v132 = vsel %vm89, %v103, -inf
    %v133 = vsel %vm89, %v108, -inf
    %v134 = vsel %vm89, %v113, -inf
    %v135 = vsel %vm89, %v118, -inf
    %v136 = vsel %vm89, %v123, -inf
    %v137 = vsel %vm89, %v128, -inf
    %138 = vrot.lane.b32.xlu0 %v39, 1
    %v139 = vpop.permute.xlu0 %138
    %140 = vrot.lane.b32.xlu0 %v40, 1
    %v141 = vpop.permute.xlu0 %140
    %142 = vrot.lane.b32.xlu0 %v41, 1
    %v143 = vpop.permute.xlu0 %142
    %144 = vrot.lane.b32.xlu0 %v42, 1
    %v145 = vpop.permute.xlu0 %144
    %146 = vrot.lane.b32.xlu0 %v43, 1
    %v147 = vpop.permute.xlu0 %146
    %148 = vrot.lane.b32.xlu0 %v44, 1
    %v149 = vpop.permute.xlu0 %148
    %150 = vrot.lane.b32.xlu0 %v45, 1
    %v151 = vpop.permute.xlu0 %150
    %152 = vrot.lane.b32.xlu0 %v46, 1
    %v153 = vpop.permute.xlu0 %152
    %v162 = vmax.f32 %v81, %v139
    %v163 = vmax.f32 %v82, %v141
    %v164 = vmax.f32 %v83, %v143
    %v165 = vmax.f32 %v84, %v145
    %v166 = vmax.f32 %v85, %v147
    %v167 = vmax.f32 %v86, %v149
    %v168 = vmax.f32 %v87, %v151
    %v169 = vmax.f32 %v88, %v153
    %vm170 = vcmp.eq.s32.totalorder %v48, 1
    %172 = vset.pattern.permute.xlu0 2
    %173 = vperm.xlu0 %172, %v162
    %v174 = vpop.permute.xlu0 %173
    %177 = vset.pattern.permute.xlu0 2
    %178 = vperm.xlu0 %177, %v163
    %v179 = vpop.permute.xlu0 %178
    %182 = vset.pattern.permute.xlu0 2
    %183 = vperm.xlu0 %182, %v164
    %v184 = vpop.permute.xlu0 %183
    %187 = vset.pattern.permute.xlu0 2
    %188 = vperm.xlu0 %187, %v165
    %v189 = vpop.permute.xlu0 %188
    %192 = vset.pattern.permute.xlu0 2
    %193 = vperm.xlu0 %192, %v166
    %v194 = vpop.permute.xlu0 %193
    %197 = vset.pattern.permute.xlu0 2
    %198 = vperm.xlu0 %197, %v167
    %v199 = vpop.permute.xlu0 %198
    %202 = vset.pattern.permute.xlu0 2
    %203 = vperm.xlu0 %202, %v168
    %v204 = vpop.permute.xlu0 %203
    %207 = vset.pattern.permute.xlu0 2
    %208 = vperm.xlu0 %207, %v169
    %v209 = vpop.permute.xlu0 %208
    %v211 = vsel %vm170, %v174, %v130
    %v212 = vsel %vm170, %v179, %v131
    %v213 = vsel %vm170, %v184, %v132
    %v214 = vsel %vm170, %v189, %v133
    %v215 = vsel %vm170, %v194, %v134
    %v216 = vsel %vm170, %v199, %v135
    %v217 = vsel %vm170, %v204, %v136
    %v218 = vsel %vm170, %v209, %v137
    %vm219 = vcmp.eq.s32.totalorder %v48, 2
    %220 = vset.pattern.permute.xlu0 4
    %221 = vperm.xlu0 %220, %v162
    %v222 = vpop.permute.xlu0 %221
    %224 = vset.pattern.permute.xlu0 4
    %225 = vperm.xlu0 %224, %v163
    %v226 = vpop.permute.xlu0 %225
    %228 = vset.pattern.permute.xlu0 4
    %229 = vperm.xlu0 %228, %v164
    %v230 = vpop.permute.xlu0 %229
    %232 = vset.pattern.permute.xlu0 4
    %233 = vperm.xlu0 %232, %v165
    %v234 = vpop.permute.xlu0 %233
    %236 = vset.pattern.permute.xlu0 4
    %237 = vperm.xlu0 %236, %v166
    %v238 = vpop.permute.xlu0 %237
    %240 = vset.pattern.permute.xlu0 4
    %241 = vperm.xlu0 %240, %v167
    %v242 = vpop.permute.xlu0 %241
    %244 = vset.pattern.permute.xlu0 4
    %245 = vperm.xlu0 %244, %v168
    %v246 = vpop.permute.xlu0 %245
    %248 = vset.pattern.permute.xlu0 4
    %249 = vperm.xlu0 %248, %v169
    %v250 = vpop.permute.xlu0 %249
    %v252 = vsel %vm219, %v222, %v211
    %v253 = vsel %vm219, %v226, %v212
    %v254 = vsel %vm219, %v230, %v213
    %v255 = vsel %vm219, %v234, %v214
    %v256 = vsel %vm219, %v238, %v215
    %v257 = vsel %vm219, %v242, %v216
    %v258 = vsel %vm219, %v246, %v217
    %v259 = vsel %vm219, %v250, %v218
    %vm260 = vcmp.eq.s32.totalorder %v48, 3
    %261 = vset.pattern.permute.xlu0 6
    %262 = vperm.xlu0 %261, %v162
    %v263 = vpop.permute.xlu0 %262
    %265 = vset.pattern.permute.xlu0 6
    %266 = vperm.xlu0 %265, %v163
    %v267 = vpop.permute.xlu0 %266
    %269 = vset.pattern.permute.xlu0 6
    %270 = vperm.xlu0 %269, %v164
    %v271 = vpop.permute.xlu0 %270
    %273 = vset.pattern.permute.xlu0 6
    %274 = vperm.xlu0 %273, %v165
    %v275 = vpop.permute.xlu0 %274
    %277 = vset.pattern.permute.xlu0 6
    %278 = vperm.xlu0 %277, %v166
    %v279 = vpop.permute.xlu0 %278
    %281 = vset.pattern.permute.xlu0 6
    %282 = vperm.xlu0 %281, %v167
    %v283 = vpop.permute.xlu0 %282
    %285 = vset.pattern.permute.xlu0 6
    %286 = vperm.xlu0 %285, %v168
    %v287 = vpop.permute.xlu0 %286
    %289 = vset.pattern.permute.xlu0 6
    %290 = vperm.xlu0 %289, %v169
    %v291 = vpop.permute.xlu0 %290
    %v293 = vsel %vm260, %v263, %v252
    %v294 = vsel %vm260, %v267, %v253
    %v295 = vsel %vm260, %v271, %v254
    %v296 = vsel %vm260, %v275, %v255
    %v297 = vsel %vm260, %v279, %v256
    %v298 = vsel %vm260, %v283, %v257
    %v299 = vsel %vm260, %v287, %v258
    %v300 = vsel %vm260, %v291, %v259
    %vm301 = vcmp.eq.s32.totalorder %v48, 4
    %302 = vset.pattern.permute.xlu0 8
    %303 = vperm.xlu0 %302, %v162
    %v304 = vpop.permute.xlu0 %303
    %306 = vset.pattern.permute.xlu0 8
    %307 = vperm.xlu0 %306, %v163
    %v308 = vpop.permute.xlu0 %307
    %310 = vset.pattern.permute.xlu0 8
    %311 = vperm.xlu0 %310, %v164
    %v312 = vpop.permute.xlu0 %311
    %314 = vset.pattern.permute.xlu0 8
    %315 = vperm.xlu0 %314, %v165
    %v316 = vpop.permute.xlu0 %315
    %318 = vset.pattern.permute.xlu0 8
    %319 = vperm.xlu0 %318, %v166
    %v320 = vpop.permute.xlu0 %319
    %322 = vset.pattern.permute.xlu0 8
    %323 = vperm.xlu0 %322, %v167
    %v324 = vpop.permute.xlu0 %323
    %326 = vset.pattern.permute.xlu0 8
    %327 = vperm.xlu0 %326, %v168
    %v328 = vpop.permute.xlu0 %327
    %330 = vset.pattern.permute.xlu0 8
    %331 = vperm.xlu0 %330, %v169
    %v332 = vpop.permute.xlu0 %331
    %v334 = vsel %vm301, %v304, %v293
    %v335 = vsel %vm301, %v308, %v294
    %v336 = vsel %vm301, %v312, %v295
    %v337 = vsel %vm301, %v316, %v296
    %v338 = vsel %vm301, %v320, %v297
    %v339 = vsel %vm301, %v324, %v298
    %v340 = vsel %vm301, %v328, %v299
    %v341 = vsel %vm301, %v332, %v300
    %vm342 = vcmp.eq.s32.totalorder %v48, 5
    %343 = vset.pattern.permute.xlu0 10
    %344 = vperm.xlu0 %343, %v162
    %v345 = vpop.permute.xlu0 %344
    %347 = vset.pattern.permute.xlu0 10
    %348 = vperm.xlu0 %347, %v163
    %v349 = vpop.permute.xlu0 %348
    %351 = vset.pattern.permute.xlu0 10
    %352 = vperm.xlu0 %351, %v164
    %v353 = vpop.permute.xlu0 %352
    %355 = vset.pattern.permute.xlu0 10
    %356 = vperm.xlu0 %355, %v165
    %v357 = vpop.permute.xlu0 %356
    %359 = vset.pattern.permute.xlu0 10
    %360 = vperm.xlu0 %359, %v166
    %v361 = vpop.permute.xlu0 %360
    %363 = vset.pattern.permute.xlu0 10
    %364 = vperm.xlu0 %363, %v167
    %v365 = vpop.permute.xlu0 %364
    %367 = vset.pattern.permute.xlu0 10
    %368 = vperm.xlu0 %367, %v168
    %v369 = vpop.permute.xlu0 %368
    %371 = vset.pattern.permute.xlu0 10
    %372 = vperm.xlu0 %371, %v169
    %v373 = vpop.permute.xlu0 %372
    %v375 = vsel %vm342, %v345, %v334
    %v376 = vsel %vm342, %v349, %v335
    %v377 = vsel %vm342, %v353, %v336
    %v378 = vsel %vm342, %v357, %v337
    %v379 = vsel %vm342, %v361, %v338
    %v380 = vsel %vm342, %v365, %v339
    %v381 = vsel %vm342, %v369, %v340
    %v382 = vsel %vm342, %v373, %v341
    %vm383 = vcmp.eq.s32.totalorder %v48, 6
    %384 = vset.pattern.permute.xlu0 12
    %385 = vperm.xlu0 %384, %v162
    %v386 = vpop.permute.xlu0 %385
    %388 = vset.pattern.permute.xlu0 12
    %389 = vperm.xlu0 %388, %v163
    %v390 = vpop.permute.xlu0 %389
    %392 = vset.pattern.permute.xlu0 12
    %393 = vperm.xlu0 %392, %v164
    %v394 = vpop.permute.xlu0 %393
    %396 = vset.pattern.permute.xlu0 12
    %397 = vperm.xlu0 %396, %v165
    %v398 = vpop.permute.xlu0 %397
    %400 = vset.pattern.permute.xlu0 12
    %401 = vperm.xlu0 %400, %v166
    %v402 = vpop.permute.xlu0 %401
    %404 = vset.pattern.permute.xlu0 12
    %405 = vperm.xlu0 %404, %v167
    %v406 = vpop.permute.xlu0 %405
    %408 = vset.pattern.permute.xlu0 12
    %409 = vperm.xlu0 %408, %v168
    %v410 = vpop.permute.xlu0 %409
    %412 = vset.pattern.permute.xlu0 12
    %413 = vperm.xlu0 %412, %v169
    %v414 = vpop.permute.xlu0 %413
    %v416 = vsel %vm383, %v386, %v375
    %v417 = vsel %vm383, %v390, %v376
    %v418 = vsel %vm383, %v394, %v377
    %v419 = vsel %vm383, %v398, %v378
    %v420 = vsel %vm383, %v402, %v379
    %v421 = vsel %vm383, %v406, %v380
    %v422 = vsel %vm383, %v410, %v381
    %v423 = vsel %vm383, %v414, %v382
    %vm424 = vcmp.eq.s32.totalorder %v48, 7
    %425 = vset.pattern.permute.xlu0 14
    %426 = vperm.xlu0 %425, %v162
    %v427 = vpop.permute.xlu0 %426
    %429 = vset.pattern.permute.xlu0 14
    %430 = vperm.xlu0 %429, %v163
    %v431 = vpop.permute.xlu0 %430
    %433 = vset.pattern.permute.xlu0 14
    %434 = vperm.xlu0 %433, %v164
    %v435 = vpop.permute.xlu0 %434
    %437 = vset.pattern.permute.xlu0 14
    %438 = vperm.xlu0 %437, %v165
    %v439 = vpop.permute.xlu0 %438
    %441 = vset.pattern.permute.xlu0 14
    %442 = vperm.xlu0 %441, %v166
    %v443 = vpop.permute.xlu0 %442
    %445 = vset.pattern.permute.xlu0 14
    %446 = vperm.xlu0 %445, %v167
    %v447 = vpop.permute.xlu0 %446
    %449 = vset.pattern.permute.xlu0 14
    %450 = vperm.xlu0 %449, %v168
    %v451 = vpop.permute.xlu0 %450
    %453 = vset.pattern.permute.xlu0 14
    %454 = vperm.xlu0 %453, %v169
    %v455 = vpop.permute.xlu0 %454
    %v457 = vsel %vm424, %v427, %v416
    %v458 = vsel %vm424, %v431, %v417
    %v459 = vsel %vm424, %v435, %v418
    %v460 = vsel %vm424, %v439, %v419
    %v461 = vsel %vm424, %v443, %v420
    %v462 = vsel %vm424, %v447, %v421
    %v463 = vsel %vm424, %v451, %v422
    %v464 = vsel %vm424, %v455, %v423
    %vm465 = vcmask 57344
    %466 = vst.msk [vmem:[#allocation5] sm:$0x1] %vm465, %v457
    %467 = vst.msk [vmem:[#allocation5 + $0x8] sm:$0x1] %vm465, %v458
    %468 = vst.msk [vmem:[#allocation5 + $0x10] sm:$0x1] %vm465, %v459
    %469 = vst.msk [vmem:[#allocation5 + $0x18] sm:$0x1] %vm465, %v460
    %470 = vst.msk [vmem:[#allocation5 + $0x20] sm:$0x1] %vm465, %v461
    %471 = vst.msk [vmem:[#allocation5 + $0x28] sm:$0x1] %vm465, %v462
    %472 = vst.msk [vmem:[#allocation5 + $0x30] sm:$0x1] %vm465, %v463
    %473 = vst.msk [vmem:[#allocation5 + $0x38] sm:$0x1] %vm465, %v464
    %s474 = scalar_lea.vmem [#allocation2], 2
    %v475 = vld [vmem:[%s474] ss:$2 sm:$0x7f]
    %s476 = scalar_lea.vmem [#allocation2], 18
    %v477 = vld [vmem:[%s476] ss:$2 sm:$0x7f]
    %s478 = scalar_lea.vmem [#allocation2], 34
    %v479 = vld [vmem:[%s478] ss:$2 sm:$0x7f]
    %s480 = scalar_lea.vmem [#allocation2], 50
    %v481 = vld [vmem:[%s480] ss:$2 sm:$0x7f]
    %s482 = scalar_lea.vmem [#allocation2], 66
    %v483 = vld [vmem:[%s482] ss:$2 sm:$0x7f]
    %s484 = scalar_lea.vmem [#allocation2], 82
    %v485 = vld [vmem:[%s484] ss:$2 sm:$0x7f]
    %s486 = scalar_lea.vmem [#allocation2], 98
    %v487 = vld [vmem:[%s486] ss:$2 sm:$0x7f]
    %s488 = scalar_lea.vmem [#allocation2], 114
    %v489 = vld [vmem:[%s488] ss:$2 sm:$0x7f]
    %s490 = scalar_lea.vmem [#allocation2], 3
    %v491 = vld [vmem:[%s490] ss:$2 sm:$0x7f]
    %s492 = scalar_lea.vmem [#allocation2], 19
    %v493 = vld [vmem:[%s492] ss:$2 sm:$0x7f]
    %s494 = scalar_lea.vmem [#allocation2], 35
    %v495 = vld [vmem:[%s494] ss:$2 sm:$0x7f]
    %s496 = scalar_lea.vmem [#allocation2], 51
    %v497 = vld [vmem:[%s496] ss:$2 sm:$0x7f]
    %s498 = scalar_lea.vmem [#allocation2], 67
    %v499 = vld [vmem:[%s498] ss:$2 sm:$0x7f]
    %s500 = scalar_lea.vmem [#allocation2], 83
    %v501 = vld [vmem:[%s500] ss:$2 sm:$0x7f]
    %s502 = scalar_lea.vmem [#allocation2], 99
    %v503 = vld [vmem:[%s502] ss:$2 sm:$0x7f]
    %s504 = scalar_lea.vmem [#allocation2], 115
    %v505 = vld [vmem:[%s504] ss:$2 sm:$0x7f]
    %s506 = scalar_lea.vmem [#allocation2], 1
    %v507 = vld [vmem:[%s506] ss:$2 sm:$0x7f]
    %s508 = scalar_lea.vmem [#allocation2], 17
    %v509 = vld [vmem:[%s508] ss:$2 sm:$0x7f]
    %s510 = scalar_lea.vmem [#allocation2], 33
    %v511 = vld [vmem:[%s510] ss:$2 sm:$0x7f]
    %s512 = scalar_lea.vmem [#allocation2], 49
    %v513 = vld [vmem:[%s512] ss:$2 sm:$0x7f]
    %s514 = scalar_lea.vmem [#allocation2], 65
    %v515 = vld [vmem:[%s514] ss:$2 sm:$0x7f]
    %s516 = scalar_lea.vmem [#allocation2], 81
    %v517 = vld [vmem:[%s516] ss:$2 sm:$0x7f]
    %s518 = scalar_lea.vmem [#allocation2], 97
    %v519 = vld [vmem:[%s518] ss:$2 sm:$0x7f]
    %s520 = scalar_lea.vmem [#allocation2], 113
    %v521 = vld [vmem:[%s520] ss:$2 sm:$0x7f]
    %v522 = vmax.f32 %v475, %v491
    %v523 = vmax.f32 %v477, %v493
    %v524 = vmax.f32 %v479, %v495
    %v525 = vmax.f32 %v481, %v497
    %v526 = vmax.f32 %v483, %v499
    %v527 = vmax.f32 %v485, %v501
    %v528 = vmax.f32 %v487, %v503
    %v529 = vmax.f32 %v489, %v505
    %v530 = vmax.f32 %v522, %v507
    %v531 = vmax.f32 %v523, %v509
    %v532 = vmax.f32 %v524, %v511
    %v533 = vmax.f32 %v525, %v513
    %v534 = vmax.f32 %v526, %v515
    %v535 = vmax.f32 %v527, %v517
    %v536 = vmax.f32 %v528, %v519
    %v537 = vmax.f32 %v529, %v521
    %546 = vrot.lane.b32.xlu0 %v530, 127
    %v547 = vpop.permute.xlu0 %546
    %548 = vrot.lane.b32.xlu0 %v531, 127
    %v549 = vpop.permute.xlu0 %548
    %550 = vrot.lane.b32.xlu0 %v532, 127
    %v551 = vpop.permute.xlu0 %550
    %552 = vrot.lane.b32.xlu0 %v533, 127
    %v553 = vpop.permute.xlu0 %552
    %554 = vrot.lane.b32.xlu0 %v534, 127
    %v555 = vpop.permute.xlu0 %554
    %556 = vrot.lane.b32.xlu0 %v535, 127
    %v557 = vpop.permute.xlu0 %556
    %558 = vrot.lane.b32.xlu0 %v536, 127
    %v559 = vpop.permute.xlu0 %558
    %560 = vrot.lane.b32.xlu0 %v537, 127
    %v561 = vpop.permute.xlu0 %560
    %v570 = vmax.f32 %v530, %v547
    %v571 = vmax.f32 %v531, %v549
    %v572 = vmax.f32 %v532, %v551
    %v573 = vmax.f32 %v533, %v553
    %v574 = vmax.f32 %v534, %v555
    %v575 = vmax.f32 %v535, %v557
    %v576 = vmax.f32 %v536, %v559
    %v577 = vmax.f32 %v537, %v561
    %579 = vset.pattern.permute.xlu0 0
    %580 = vperm.xlu0 %579, %v570
    %v581 = vpop.permute.xlu0 %580
    %584 = vset.pattern.permute.xlu0 0
    %585 = vperm.xlu0 %584, %v571
    %v586 = vpop.permute.xlu0 %585
    %589 = vset.pattern.permute.xlu0 0
    %590 = vperm.xlu0 %589, %v572
    %v591 = vpop.permute.xlu0 %590
    %594 = vset.pattern.permute.xlu0 0
    %595 = vperm.xlu0 %594, %v573
    %v596 = vpop.permute.xlu0 %595
    %599 = vset.pattern.permute.xlu0 0
    %600 = vperm.xlu0 %599, %v574
    %v601 = vpop.permute.xlu0 %600
    %604 = vset.pattern.permute.xlu0 0
    %605 = vperm.xlu0 %604, %v575
    %v606 = vpop.permute.xlu0 %605
    %609 = vset.pattern.permute.xlu0 0
    %610 = vperm.xlu0 %609, %v576
    %v611 = vpop.permute.xlu0 %610
    %614 = vset.pattern.permute.xlu0 0
    %615 = vperm.xlu0 %614, %v577
    %v616 = vpop.permute.xlu0 %615
    %v618 = vsel %vm89, %v581, -inf
    %v619 = vsel %vm89, %v586, -inf
    %v620 = vsel %vm89, %v591, -inf
    %v621 = vsel %vm89, %v596, -inf
    %v622 = vsel %vm89, %v601, -inf
    %v623 = vsel %vm89, %v606, -inf
    %v624 = vsel %vm89, %v611, -inf
    %v625 = vsel %vm89, %v616, -inf
    %626 = vrot.lane.b32.xlu0 %v530, 1
    %v627 = vpop.permute.xlu0 %626
    %628 = vrot.lane.b32.xlu0 %v531, 1
    %v629 = vpop.permute.xlu0 %628
    %630 = vrot.lane.b32.xlu0 %v532, 1
    %v631 = vpop.permute.xlu0 %630
    %632 = vrot.lane.b32.xlu0 %v533, 1
    %v633 = vpop.permute.xlu0 %632
    %634 = vrot.lane.b32.xlu0 %v534, 1
    %v635 = vpop.permute.xlu0 %634
    %636 = vrot.lane.b32.xlu0 %v535, 1
    %v637 = vpop.permute.xlu0 %636
    %638 = vrot.lane.b32.xlu0 %v536, 1
    %v639 = vpop.permute.xlu0 %638
    %640 = vrot.lane.b32.xlu0 %v537, 1
    %v641 = vpop.permute.xlu0 %640
    %v650 = vmax.f32 %v570, %v627
    %v651 = vmax.f32 %v571, %v629
    %v652 = vmax.f32 %v572, %v631
    %v653 = vmax.f32 %v573, %v633
    %v654 = vmax.f32 %v574, %v635
    %v655 = vmax.f32 %v575, %v637
    %v656 = vmax.f32 %v576, %v639
    %v657 = vmax.f32 %v577, %v641
    %659 = vset.pattern.permute.xlu0 2
    %660 = vperm.xlu0 %659, %v650
    %v661 = vpop.permute.xlu0 %660
    %664 = vset.pattern.permute.xlu0 2
    %665 = vperm.xlu0 %664, %v651
    %v666 = vpop.permute.xlu0 %665
    %669 = vset.pattern.permute.xlu0 2
    %670 = vperm.xlu0 %669, %v652
    %v671 = vpop.permute.xlu0 %670
    %674 = vset.pattern.permute.xlu0 2
    %675 = vperm.xlu0 %674, %v653
    %v676 = vpop.permute.xlu0 %675
    %679 = vset.pattern.permute.xlu0 2
    %680 = vperm.xlu0 %679, %v654
    %v681 = vpop.permute.xlu0 %680
    %684 = vset.pattern.permute.xlu0 2
    %685 = vperm.xlu0 %684, %v655
    %v686 = vpop.permute.xlu0 %685
    %689 = vset.pattern.permute.xlu0 2
    %690 = vperm.xlu0 %689, %v656
    %v691 = vpop.permute.xlu0 %690
    %694 = vset.pattern.permute.xlu0 2
    %695 = vperm.xlu0 %694, %v657
    %v696 = vpop.permute.xlu0 %695
    %v698 = vsel %vm170, %v661, %v618
    %v699 = vsel %vm170, %v666, %v619
    %v700 = vsel %vm170, %v671, %v620
    %v701 = vsel %vm170, %v676, %v621
    %v702 = vsel %vm170, %v681, %v622
    %v703 = vsel %vm170, %v686, %v623
    %v704 = vsel %vm170, %v691, %v624
    %v705 = vsel %vm170, %v696, %v625
    %706 = vset.pattern.permute.xlu0 4
    %707 = vperm.xlu0 %706, %v650
    %v708 = vpop.permute.xlu0 %707
    %710 = vset.pattern.permute.xlu0 4
    %711 = vperm.xlu0 %710, %v651
    %v712 = vpop.permute.xlu0 %711
    %714 = vset.pattern.permute.xlu0 4
    %715 = vperm.xlu0 %714, %v652
    %v716 = vpop.permute.xlu0 %715
    %718 = vset.pattern.permute.xlu0 4
    %719 = vperm.xlu0 %718, %v653
    %v720 = vpop.permute.xlu0 %719
    %722 = vset.pattern.permute.xlu0 4
    %723 = vperm.xlu0 %722, %v654
    %v724 = vpop.permute.xlu0 %723
    %726 = vset.pattern.permute.xlu0 4
    %727 = vperm.xlu0 %726, %v655
    %v728 = vpop.permute.xlu0 %727
    %730 = vset.pattern.permute.xlu0 4
    %731 = vperm.xlu0 %730, %v656
    %v732 = vpop.permute.xlu0 %731
    %734 = vset.pattern.permute.xlu0 4
    %735 = vperm.xlu0 %734, %v657
    %v736 = vpop.permute.xlu0 %735
    %v738 = vsel %vm219, %v708, %v698
    %v739 = vsel %vm219, %v712, %v699
    %v740 = vsel %vm219, %v716, %v700
    %v741 = vsel %vm219, %v720, %v701
    %v742 = vsel %vm219, %v724, %v702
    %v743 = vsel %vm219, %v728, %v703
    %v744 = vsel %vm219, %v732, %v704
    %v745 = vsel %vm219, %v736, %v705
    %746 = vset.pattern.permute.xlu0 6
    %747 = vperm.xlu0 %746, %v650
    %v748 = vpop.permute.xlu0 %747
    %750 = vset.pattern.permute.xlu0 6
    %751 = vperm.xlu0 %750, %v651
    %v752 = vpop.permute.xlu0 %751
    %754 = vset.pattern.permute.xlu0 6
    %755 = vperm.xlu0 %754, %v652
    %v756 = vpop.permute.xlu0 %755
    %758 = vset.pattern.permute.xlu0 6
    %759 = vperm.xlu0 %758, %v653
    %v760 = vpop.permute.xlu0 %759
    %762 = vset.pattern.permute.xlu0 6
    %763 = vperm.xlu0 %762, %v654
    %v764 = vpop.permute.xlu0 %763
    %766 = vset.pattern.permute.xlu0 6
    %767 = vperm.xlu0 %766, %v655
    %v768 = vpop.permute.xlu0 %767
    %770 = vset.pattern.permute.xlu0 6
    %771 = vperm.xlu0 %770, %v656
    %v772 = vpop.permute.xlu0 %771
    %774 = vset.pattern.permute.xlu0 6
    %775 = vperm.xlu0 %774, %v657
    %v776 = vpop.permute.xlu0 %775
    %v778 = vsel %vm260, %v748, %v738
    %v779 = vsel %vm260, %v752, %v739
    %v780 = vsel %vm260, %v756, %v740
    %v781 = vsel %vm260, %v760, %v741
    %v782 = vsel %vm260, %v764, %v742
    %v783 = vsel %vm260, %v768, %v743
    %v784 = vsel %vm260, %v772, %v744
    %v785 = vsel %vm260, %v776, %v745
    %786 = vset.pattern.permute.xlu0 8
    %787 = vperm.xlu0 %786, %v650
    %v788 = vpop.permute.xlu0 %787
    %790 = vset.pattern.permute.xlu0 8
    %791 = vperm.xlu0 %790, %v651
    %v792 = vpop.permute.xlu0 %791
    %794 = vset.pattern.permute.xlu0 8
    %795 = vperm.xlu0 %794, %v652
    %v796 = vpop.permute.xlu0 %795
    %798 = vset.pattern.permute.xlu0 8
    %799 = vperm.xlu0 %798, %v653
    %v800 = vpop.permute.xlu0 %799
    %802 = vset.pattern.permute.xlu0 8
    %803 = vperm.xlu0 %802, %v654
    %v804 = vpop.permute.xlu0 %803
    %806 = vset.pattern.permute.xlu0 8
    %807 = vperm.xlu0 %806, %v655
    %v808 = vpop.permute.xlu0 %807
    %810 = vset.pattern.permute.xlu0 8
    %811 = vperm.xlu0 %810, %v656
    %v812 = vpop.permute.xlu0 %811
    %814 = vset.pattern.permute.xlu0 8
    %815 = vperm.xlu0 %814, %v657
    %v816 = vpop.permute.xlu0 %815
    %v818 = vsel %vm301, %v788, %v778
    %v819 = vsel %vm301, %v792, %v779
    %v820 = vsel %vm301, %v796, %v780
    %v821 = vsel %vm301, %v800, %v781
    %v822 = vsel %vm301, %v804, %v782
    %v823 = vsel %vm301, %v808, %v783
    %v824 = vsel %vm301, %v812, %v784
    %v825 = vsel %vm301, %v816, %v785
    %826 = vset.pattern.permute.xlu0 10
    %827 = vperm.xlu0 %826, %v650
    %v828 = vpop.permute.xlu0 %827
    %830 = vset.pattern.permute.xlu0 10
    %831 = vperm.xlu0 %830, %v651
    %v832 = vpop.permute.xlu0 %831
    %834 = vset.pattern.permute.xlu0 10
    %835 = vperm.xlu0 %834, %v652
    %v836 = vpop.permute.xlu0 %835
    %838 = vset.pattern.permute.xlu0 10
    %839 = vperm.xlu0 %838, %v653
    %v840 = vpop.permute.xlu0 %839
    %842 = vset.pattern.permute.xlu0 10
    %843 = vperm.xlu0 %842, %v654
    %v844 = vpop.permute.xlu0 %843
    %846 = vset.pattern.permute.xlu0 10
    %847 = vperm.xlu0 %846, %v655
    %v848 = vpop.permute.xlu0 %847
    %850 = vset.pattern.permute.xlu0 10
    %851 = vperm.xlu0 %850, %v656
    %v852 = vpop.permute.xlu0 %851
    %854 = vset.pattern.permute.xlu0 10
    %855 = vperm.xlu0 %854, %v657
    %v856 = vpop.permute.xlu0 %855
    %v858 = vsel %vm342, %v828, %v818
    %v859 = vsel %vm342, %v832, %v819
    %v860 = vsel %vm342, %v836, %v820
    %v861 = vsel %vm342, %v840, %v821
    %v862 = vsel %vm342, %v844, %v822
    %v863 = vsel %vm342, %v848, %v823
    %v864 = vsel %vm342, %v852, %v824
    %v865 = vsel %vm342, %v856, %v825
    %866 = vset.pattern.permute.xlu0 12
    %867 = vperm.xlu0 %866, %v650
    %v868 = vpop.permute.xlu0 %867
    %870 = vset.pattern.permute.xlu0 12
    %871 = vperm.xlu0 %870, %v651
    %v872 = vpop.permute.xlu0 %871
    %874 = vset.pattern.permute.xlu0 12
    %875 = vperm.xlu0 %874, %v652
    %v876 = vpop.permute.xlu0 %875
    %878 = vset.pattern.permute.xlu0 12
    %879 = vperm.xlu0 %878, %v653
    %v880 = vpop.permute.xlu0 %879
    %882 = vset.pattern.permute.xlu0 12
    %883 = vperm.xlu0 %882, %v654
    %v884 = vpop.permute.xlu0 %883
    %886 = vset.pattern.permute.xlu0 12
    %887 = vperm.xlu0 %886, %v655
    %v888 = vpop.permute.xlu0 %887
    %890 = vset.pattern.permute.xlu0 12
    %891 = vperm.xlu0 %890, %v656
    %v892 = vpop.permute.xlu0 %891
    %894 = vset.pattern.permute.xlu0 12
    %895 = vperm.xlu0 %894, %v657
    %v896 = vpop.permute.xlu0 %895
    %v898 = vsel %vm383, %v868, %v858
    %v899 = vsel %vm383, %v872, %v859
    %v900 = vsel %vm383, %v876, %v860
    %v901 = vsel %vm383, %v880, %v861
    %v902 = vsel %vm383, %v884, %v862
    %v903 = vsel %vm383, %v888, %v863
    %v904 = vsel %vm383, %v892, %v864
    %v905 = vsel %vm383, %v896, %v865
    %906 = vset.pattern.permute.xlu0 14
    %907 = vperm.xlu0 %906, %v650
    %v908 = vpop.permute.xlu0 %907
    %910 = vset.pattern.permute.xlu0 14
    %911 = vperm.xlu0 %910, %v651
    %v912 = vpop.permute.xlu0 %911
    %914 = vset.pattern.permute.xlu0 14
    %915 = vperm.xlu0 %914, %v652
    %v916 = vpop.permute.xlu0 %915
    %918 = vset.pattern.permute.xlu0 14
    %919 = vperm.xlu0 %918, %v653
    %v920 = vpop.permute.xlu0 %919
    %922 = vset.pattern.permute.xlu0 14
    %923 = vperm.xlu0 %922, %v654
    %v924 = vpop.permute.xlu0 %923
    %926 = vset.pattern.permute.xlu0 14
    %927 = vperm.xlu0 %926, %v655
    %v928 = vpop.permute.xlu0 %927
    %930 = vset.pattern.permute.xlu0 14
    %931 = vperm.xlu0 %930, %v656
    %v932 = vpop.permute.xlu0 %931
    %934 = vset.pattern.permute.xlu0 14
    %935 = vperm.xlu0 %934, %v657
    %v936 = vpop.permute.xlu0 %935
    %v938 = vsel %vm424, %v908, %v898
    %v939 = vsel %vm424, %v912, %v899
    %v940 = vsel %vm424, %v916, %v900
    %v941 = vsel %vm424, %v920, %v901
    %v942 = vsel %vm424, %v924, %v902
    %v943 = vsel %vm424, %v928, %v903
    %v944 = vsel %vm424, %v932, %v904
    %v945 = vsel %vm424, %v936, %v905
    %vm946 = vcmask 63488
    %947 = vst.msk [vmem:[#allocation5 + $0x1] sm:$0x7f] %vm946, %v938
    %948 = vst.msk [vmem:[#allocation5 + $0x9] sm:$0x7f] %vm946, %v939
    %949 = vst.msk [vmem:[#allocation5 + $0x11] sm:$0x7f] %vm946, %v940
    %950 = vst.msk [vmem:[#allocation5 + $0x19] sm:$0x7f] %vm946, %v941
    %951 = vst.msk [vmem:[#allocation5 + $0x21] sm:$0x7f] %vm946, %v942
    %952 = vst.msk [vmem:[#allocation5 + $0x29] sm:$0x7f] %vm946, %v943
    %953 = vst.msk [vmem:[#allocation5 + $0x31] sm:$0x7f] %vm946, %v944
    %954 = vst.msk [vmem:[#allocation5 + $0x39] sm:$0x7f] %vm946, %v945
    // Predicated region
    $region10: #{sampling_forward.1} parent=1 // pred_check
      _
    $region11: #{sampling_forward.1} parent=1 // pred_check_branch
      %956 = sbr.rel (0) target = $region13
    $region12: #{sampling_forward.1} parent=1 // pred_region
      %s958 = ssub.s32 1024, 1024
      %959 = vsyncadd [#allocation4], %s958
      %s960 = sshll.u32 [#allocation5], 4
      %s961 = int_to_ptr.vmem [resolvable:$true] %s960
      %966 = dma.vmem_to_hbm [thread:$0]  %s961, 1024, %s1, [#allocation4], 128, 128, 8
    $region13: #{sampling_forward.1} parent=1 // pred_fallthru
      _
    // Predicated region
    $region14: #{sampling_forward.1} parent=1 // pred_check
      _
    $region15: #{sampling_forward.1} parent=1 // pred_check_branch
      %968 = sbr.rel (0) target = $region17
    $region16: #{sampling_forward.1} parent=1 // pred_region
      %969 = dma.done [#allocation4], 1024
    $region17: #{sampling_forward.1} parent=1 // pred_fallthru
      _
    %970 = vsyncpa [#allocation3], 1
    %971 = vsyncpa [#allocation4], 1

</llo_original>
